<compile_context>
chip_gen: v5e
topology: v5e:2x2
jax: 0.10.0
libtpu: 0.0.40
codegen_flags: <defaults>
</compile_context>

<pallas_src>
import functools

import jax
import jax.numpy as jnp
from jax.experimental import pallas as pl
from jax.experimental.pallas import tpu as pltpu


_PARALLEL = pltpu.CompilerParams(dimension_semantics=("parallel",))


# ---------------------------------------------------------------------------
# Pallas kernels (the matmul hot paths, gridded over batch)
# ---------------------------------------------------------------------------
def _pwconv1_starrelu_kernel(x_ref, w1t_ref, sb_ref, o_ref):
    # x: (1, dim, HW), w1t: (med, dim), o: (1, med, HW)
    # o = StarReLU(W1^T @ x) = s * relu(W1^T x)^2 + b
    s = sb_ref[0, 0]          # hoisted scalar reads (SMEM)
    b = sb_ref[0, 1]
    y = jnp.dot(w1t_ref[...], x_ref[0], preferred_element_type=jnp.float32)
    r = jnp.maximum(y, 0.0)
    o_ref[0] = (r * r) * s + b


def pwconv1_starrelu(x3, w1_t, sb):
    B, dim, HW = x3.shape
    med = w1_t.shape[0]
    return pl.pallas_call(
        _pwconv1_starrelu_kernel,
        out_shape=jax.ShapeDtypeStruct((B, med, HW), jnp.float32),
        grid=(B,),
        in_specs=[
            pl.BlockSpec((1, dim, HW), lambda bi: (bi, 0, 0)),
            pl.BlockSpec((med, dim), lambda bi: (0, 0)),
            pl.BlockSpec(memory_space=pltpu.MemorySpace.SMEM),
        ],
        out_specs=pl.BlockSpec((1, med, HW), lambda bi: (bi, 0, 0)),
        compiler_params=_PARALLEL,
    )(x3, w1_t, sb)


def _combine_pwconv2_kernel(x_ref, w1t_ref, w2t_ref, sb_ref, srT_ref, swt_ref,
                            xf_ref, o_ref):
    # Re-derive x_pw = StarReLU(W1^T x) in-register (K = dim is tiny) instead of
    # streaming the (med, HW) slab back from HBM, synthesize the spatial weight
    # in-register from the per-batch routeing (med, nf) and the shared
    # spatial_weights (nf, HW) (K = nf dot, sw_t slab never materialized), then
    # fuse the spatial mix and pwconv2:
    #   o = W2^T @ (x_pw * (srT @ swt) + x_ifft)
    s = sb_ref[0, 0]
    b = sb_ref[0, 1]
    y = jnp.dot(w1t_ref[...], x_ref[0], preferred_element_type=jnp.float32)
    r = jnp.maximum(y, 0.0)
    x_pw = (r * r) * s + b                                                  # (med, HW)
    sw = jnp.dot(srT_ref[0], swt_ref[...], preferred_element_type=jnp.float32)  # (med, HW)
    fused = x_pw * sw + xf_ref[0]
    o_ref[0] = jnp.dot(w2t_ref[...], fused, preferred_element_type=jnp.float32)


def combine_pwconv2(x3, w1_t, w2_t, sb, srT, swt, xf3):
    B, dim, HW = x3.shape
    med = w1_t.shape[0]
    nf = swt.shape[0]
    c_out = w2_t.shape[0]
    return pl.pallas_call(
        _combine_pwconv2_kernel,
        out_shape=jax.ShapeDtypeStruct((B, c_out, HW), jnp.float32),
        grid=(B,),
        in_specs=[
            pl.BlockSpec((1, dim, HW), lambda bi: (bi, 0, 0)),
            pl.BlockSpec((med, dim), lambda bi: (0, 0)),
            pl.BlockSpec((c_out, med), lambda bi: (0, 0)),
            pl.BlockSpec(memory_space=pltpu.MemorySpace.SMEM),
            pl.BlockSpec((1, med, nf), lambda bi: (bi, 0, 0)),
            pl.BlockSpec((nf, HW), lambda bi: (0, 0)),
            pl.BlockSpec((1, med, HW), lambda bi: (bi, 0, 0)),
        ],
        out_specs=pl.BlockSpec((1, c_out, HW), lambda bi: (bi, 0, 0)),
        compiler_params=_PARALLEL,
    )(x3, w1_t, w2_t, sb, srT, swt, xf3)


# ---------------------------------------------------------------------------
# Plain-JAX glue (tiny convs, FFT, routings)
# ---------------------------------------------------------------------------
def conv2d_nchw(x, w, bias=None, padding=1, groups=1):
    out = jax.lax.conv_general_dilated(
        x, w, window_strides=(1, 1),
        padding=[(padding, padding), (padding, padding)],
        dimension_numbers=("NCHW", "OIHW", "NCHW"),
        feature_group_count=groups)
    if bias is not None:
        out = out + bias[None, :, None, None]
    return out


def dynamic_fs_filter_forward(x_ori, p, cfg, use_pallas=True):
    B, _, H, W = x_ori.shape
    dim, med, nf = cfg["dim"], cfg["med"], cfg["nf"]
    HW = H * W

    # NCHW is already contiguous as (B, C, H*W): free reshape, no transpose.
    x3 = x_ori.reshape(B, dim, HW)
    sb = jnp.stack([p["star_scale"], p["star_bias"]]).reshape(1, 2)  # SMEM scalars

    # --- reweight branch (NNConv): 1x1 -> ReLU -> WTConv2d -> ReLU -> 1x1 ---
    # Stays in XLA / NCHW (tiny outputs); the H*W mean commutes with the 1x1 fc2,
    # so the (nf*med, B*H*W) intermediate of the previous version is never built.
    hid = p["rw_fc1_w"].shape[1]
    fc1_w_oihw = p["rw_fc1_w"].T[:, :, None, None]                   # (hid, dim, 1, 1)
    h = conv2d_nchw(x_ori, fc1_w_oihw, bias=p["rw_fc1_b"], padding=0)
    h = jnp.maximum(h, 0.0)
    # TODO(synk): WTConv2d source not provided; substituting its base depthwise 5x5 conv path (wavelet branches omitted).
    h = conv2d_nchw(h, p["rw_wt_w"], padding=2, groups=hid)
    h = jnp.maximum(h, 0.0)
    h_mean = h.mean(axis=(2, 3))                                     # (B, hid)
    r_logits = h_mean @ p["rw_fc2_w"] + p["rw_fc2_b"]                # (B, nf*med)
    routeing = jax.nn.softmax(r_logits.reshape(B, nf, med), axis=1)

    # --- spatial_reweight branch (Convs): 3x3 -> ReLU -> 3x3 (mean stays AFTER convs) ---
    # TODO(synk): DeformConv2d source not provided; substituting standard 3x3 convs (no deformable offsets / modulation).
    sp = conv2d_nchw(x_ori, p["sp_fc1_w"], padding=1)
    sp = jnp.maximum(sp, 0.0)
    sp = conv2d_nchw(sp, p["sp_fc2_w"], padding=1)
    spatial_routeing = jax.nn.softmax(sp.mean(axis=(2, 3)).reshape(B, nf, med), axis=1)

    # --- pwconv1 + StarReLU (Pallas, lane-dense (B, med, HW) output) ---
    w1_t = p["w1"].T                                                 # (med, dim)
    if use_pallas:
        x_pw3 = pwconv1_starrelu(x3, w1_t, sb)                       # (B, med, HW)
    else:
        y = jnp.einsum("md,bdn->bmn", w1_t, x3)
        r = jnp.maximum(y, 0.0)
        x_pw3 = (r * r) * p["star_scale"] + p["star_bias"]

    # --- spectral filtering ---
    # TODO(synk): rfft2/irfft2 have no clean Pallas equivalent; complex multiply is
    # left to XLA fusion (per perf review) so xr/xi/wr/wi never round-trip to HBM
    # through a pallas_call boundary.
    xf = jnp.fft.rfft2(x_pw3.reshape(B, med, H, W), axes=(2, 3), norm="ortho")
    cw = p["complex_weights"]                                        # (H, fs, nf, 2)
    wr = jnp.einsum("bfc,hwf->bchw", routeing, cw[..., 0])           # (B, med, H, fs)
    wi = jnp.einsum("bfc,hwf->bchw", routeing, cw[..., 1])
    x_filt = jnp.fft.irfft2(xf * jax.lax.complex(wr, wi), s=(H, W),
                            axes=(2, 3), norm="ortho")
    xf3 = x_filt.reshape(B, med, HW)

    # --- fused spatial mix + pwconv2 (Pallas) ---
    w2_t = p["w2"].T                                                 # (dim, med)
    srT = jnp.transpose(spatial_routeing, (0, 2, 1))                 # (B, med, nf)  tiny
    swt = p["spatial_weights"].reshape(HW, nf).T                     # (nf, HW)      tiny
    if use_pallas:
        out3 = combine_pwconv2(x3, w1_t, w2_t, sb, srT, swt, xf3)    # (B, dim, HW)
    else:
        y = jnp.einsum("md,bdn->bmn", w1_t, x3)
        r = jnp.maximum(y, 0.0)
        x_pw = (r * r) * p["star_scale"] + p["star_bias"]
        sw = jnp.einsum("bmf,fn->bmn", srT, swt)
        fused = x_pw * sw + xf3
        out3 = jnp.einsum("dm,bmn->bdn", w2_t, fused)

    return out3.reshape(B, dim, H, W)                                # NCHW, free reshape


# ---------------------------------------------------------------------------
if __name__ == "__main__":
    # Module config: dim=8, expansion_ratio=2 -> med=16, num_filters=4, size=24
    B, dim, size, nf = 2, 8, 24, 4
    med = 2 * dim
    fs = size // 2 + 1
    hid_rw = int(0.5 * dim)   # NNConv hidden  (reweight_expansion_ratio = 0.5)
    hid_sp = int(0.5 * dim)   # Convs hidden   (mlp_ratio = 0.5)
    cfg = dict(dim=dim, med=med, nf=nf, size=size, fs=fs)

    key = jax.random.PRNGKey(0)
    ks = jax.random.split(key, 12)
    p = {
        "w1": 0.05 * jax.random.normal(ks[0], (dim, med), jnp.float32),
        "w2": 0.05 * jax.random.normal(ks[1], (med, dim), jnp.float32),
        "star_scale": jnp.array(1.0, jnp.float32),
        "star_bias": jnp.array(0.0, jnp.float32),
        "complex_weights": 0.02 * jax.random.normal(ks[2], (size, fs, nf, 2), jnp.float32),
        "spatial_weights": 0.03 * jax.random.normal(ks[3], (size, size, nf), jnp.float32),
        "rw_fc1_w": 0.1 * jax.random.normal(ks[4], (dim, hid_rw), jnp.float32),
        "rw_fc1_b": jnp.zeros((hid_rw,), jnp.float32),
        "rw_wt_w": 0.1 * jax.random.normal(ks[5], (hid_rw, 1, 5, 5), jnp.float32),
        "rw_fc2_w": 0.1 * jax.random.normal(ks[6], (hid_rw, nf * med), jnp.float32),
        "rw_fc2_b": 0.01 * jax.random.normal(ks[7], (nf * med,), jnp.float32),
        "sp_fc1_w": 0.1 * jax.random.normal(ks[8], (hid_sp, dim, 3, 3), jnp.float32),
        "sp_fc2_w": 0.1 * jax.random.normal(ks[9], (nf * med, hid_sp, 3, 3), jnp.float32),
    }

    x = jax.random.normal(ks[10], (B, dim, size, size), jnp.float32)

    fwd = jax.jit(functools.partial(dynamic_fs_filter_forward, cfg=cfg, use_pallas=True))
    ref_fwd = jax.jit(functools.partial(dynamic_fs_filter_forward, cfg=cfg, use_pallas=False))

    out = jax.block_until_ready(fwd(x, p))
    ref = jax.block_until_ready(ref_fwd(x, p))

    assert out.shape == (B, dim, size, size), out.shape
    max_err = float(jnp.max(jnp.abs(out - ref)))
    assert max_err < 5e-4, max_err
    print("KERNEL_OK")
</pallas_src>

<mosaic_0001>
module attributes {stable_mosaic.version = 11 : i64} {
  func.func @_pwconv1_starrelu_kernel(%arg0: i32, %arg1: memref<1x8x576xf32, #tpu.memory_space<vmem>>, %arg2: memref<16x8xf32, #tpu.memory_space<vmem>>, %arg3: memref<1x2xf32, #tpu.memory_space<smem>>, %arg4: memref<1x16x576xf32, #tpu.memory_space<vmem>>) attributes {dimension_semantics = [#tpu.dimension_semantics<parallel>], iteration_bounds = array<i64: 2>, scalar_prefetch = 0 : i64, scratch_operands = 0 : i64, tpu.core_type = #tpu.core_type<tc>, window_params = [{transform_indices = @transform_0, window_bounds = array<i64: 1, 8, 576>}, {pipeline_mode = #tpu.pipeline_mode<synchronous>, transform_indices = @transform_1, window_bounds = array<i64: 16, 8>}, {transform_indices = @transform_2, window_bounds = array<i64: 1, 2>}, {transform_indices = @transform_3, window_bounds = array<i64: 1, 16, 576>}]} {
    %c0 = arith.constant 0 : index
    %c0_0 = arith.constant 0 : index
    %0 = memref.load %arg3[%c0, %c0_0] : memref<1x2xf32, #tpu.memory_space<smem>>
    %c0_1 = arith.constant 0 : index
    %c1 = arith.constant 1 : index
    %1 = memref.load %arg3[%c0_1, %c1] : memref<1x2xf32, #tpu.memory_space<smem>>
    %c0_2 = arith.constant 0 : index
    %c0_3 = arith.constant 0 : index
    %2 = vector.load %arg2[%c0_2, %c0_3] : memref<16x8xf32, #tpu.memory_space<vmem>>, vector<16x8xf32>
    %c0_4 = arith.constant 0 : index
    %c0_5 = arith.constant 0 : index
    %c0_6 = arith.constant 0 : index
    %3 = vector.load %arg1[%c0_4, %c0_5, %c0_6] : memref<1x8x576xf32, #tpu.memory_space<vmem>>, vector<1x8x576xf32>
    %4 = vector.shape_cast %3 : vector<1x8x576xf32> to vector<8x576xf32>
    %cst = arith.constant dense<0.000000e+00> : vector<16x576xf32>
    %5 = tpu.matmul %2, %4, %cst {dimension_numbers = #tpu.dot_dimension_numbers<[1], [0], [0], [1], [0, 0, 1, 1], [], []>} : vector<16x8xf32>, vector<8x576xf32>, vector<16x576xf32> -> vector<16x576xf32>
    %cst_7 = arith.constant 0.000000e+00 : f32
    %6 = vector.broadcast %cst_7 : f32 to vector<16x576xf32>
    %7 = arith.maximumf %5, %6 : vector<16x576xf32>
    %8 = arith.mulf %7, %7 : vector<16x576xf32>
    %9 = vector.broadcast %0 : f32 to vector<16x576xf32>
    %10 = arith.mulf %8, %9 : vector<16x576xf32>
    %11 = vector.broadcast %1 : f32 to vector<16x576xf32>
    %12 = arith.addf %10, %11 : vector<16x576xf32>
    %c0_8 = arith.constant 0 : index
    %c0_9 = arith.constant 0 : index
    %c0_10 = arith.constant 0 : index
    %13 = vector.load %arg4[%c0_8, %c0_9, %c0_10] : memref<1x16x576xf32, #tpu.memory_space<vmem>>, vector<1x16x576xf32>
    %14 = vector.shape_cast %13 : vector<1x16x576xf32> to vector<16x576xf32>
    %15 = vector.shape_cast %12 : vector<16x576xf32> to vector<1x16x576xf32>
    tpu.vector_store %arg4[%c0_8, %c0_9, %c0_10], %15 {strides = array<i32>} : memref<1x16x576xf32, #tpu.memory_space<vmem>>, vector<1x16x576xf32>,
    return
  }
  func.func @transform_0(%arg0: i32) -> (i32, i32, i32) {
    %c0_i32 = arith.constant 0 : i32
    %c0_i32_0 = arith.constant 0 : i32
    %c0_i32_1 = arith.constant 0 : i32
    return %arg0, %c0_i32, %c0_i32_0 : i32, i32, i32
  }
  func.func @transform_1(%arg0: i32) -> (i32, i32) {
    %c0_i32 = arith.constant 0 : i32
    %c0_i32_0 = arith.constant 0 : i32
    %c0_i32_1 = arith.constant 0 : i32
    return %c0_i32, %c0_i32_0 : i32, i32
  }
  func.func @transform_2(%arg0: i32) -> (i32, i32) {
    %c0_i32 = arith.constant 0 : i32
    %c0_i32_0 = arith.constant 0 : i32
    %c0_i32_1 = arith.constant 0 : i32
    return %c0_i32, %c0_i32_0 : i32, i32
  }
  func.func @transform_3(%arg0: i32) -> (i32, i32, i32) {
    %c0_i32 = arith.constant 0 : i32
    %c0_i32_0 = arith.constant 0 : i32
    %c0_i32_1 = arith.constant 0 : i32
    return %arg0, %c0_i32, %c0_i32_0 : i32, i32, i32
  }
}

module attributes {stable_mosaic.version = 11 : i64} {
  func.func @_combine_pwconv2_kernel(%arg0: i32, %arg1: memref<1x8x576xf32, #tpu.memory_space<vmem>>, %arg2: memref<16x8xf32, #tpu.memory_space<vmem>>, %arg3: memref<8x16xf32, #tpu.memory_space<vmem>>, %arg4: memref<1x2xf32, #tpu.memory_space<smem>>, %arg5: memref<1x16x4xf32, #tpu.memory_space<vmem>>, %arg6: memref<4x576xf32, #tpu.memory_space<vmem>>, %arg7: memref<1x16x576xf32, #tpu.memory_space<vmem>>, %arg8: memref<1x8x576xf32, #tpu.memory_space<vmem>>) attributes {dimension_semantics = [#tpu.dimension_semantics<parallel>], iteration_bounds = array<i64: 2>, scalar_prefetch = 0 : i64, scratch_operands = 0 : i64, tpu.core_type = #tpu.core_type<tc>, window_params = [{transform_indices = @transform_0, window_bounds = array<i64: 1, 8, 576>}, {pipeline_mode = #tpu.pipeline_mode<synchronous>, transform_indices = @transform_1, window_bounds = array<i64: 16, 8>}, {pipeline_mode = #tpu.pipeline_mode<synchronous>, transform_indices = @transform_2, window_bounds = array<i64: 8, 16>}, {transform_indices = @transform_3, window_bounds = array<i64: 1, 2>}, {transform_indices = @transform_4, window_bounds = array<i64: 1, 16, 4>}, {pipeline_mode = #tpu.pipeline_mode<synchronous>, transform_indices = @transform_5, window_bounds = array<i64: 4, 576>}, {transform_indices = @transform_6, window_bounds = array<i64: 1, 16, 576>}, {transform_indices = @transform_7, window_bounds = array<i64: 1, 8, 576>}]} {
    %c0 = arith.constant 0 : index
    %c0_0 = arith.constant 0 : index
    %0 = memref.load %arg4[%c0, %c0_0] : memref<1x2xf32, #tpu.memory_space<smem>>
    %c0_1 = arith.constant 0 : index
    %c1 = arith.constant 1 : index
    %1 = memref.load %arg4[%c0_1, %c1] : memref<1x2xf32, #tpu.memory_space<smem>>
    %c0_2 = arith.constant 0 : index
    %c0_3 = arith.constant 0 : index
    %2 = vector.load %arg2[%c0_2, %c0_3] : memref<16x8xf32, #tpu.memory_space<vmem>>, vector<16x8xf32>
    %c0_4 = arith.constant 0 : index
    %c0_5 = arith.constant 0 : index
    %c0_6 = arith.constant 0 : index
    %3 = vector.load %arg1[%c0_4, %c0_5, %c0_6] : memref<1x8x576xf32, #tpu.memory_space<vmem>>, vector<1x8x576xf32>
    %4 = vector.shape_cast %3 : vector<1x8x576xf32> to vector<8x576xf32>
    %cst = arith.constant dense<0.000000e+00> : vector<16x576xf32>
    %5 = tpu.matmul %2, %4, %cst {dimension_numbers = #tpu.dot_dimension_numbers<[1], [0], [0], [1], [0, 0, 1, 1], [], []>} : vector<16x8xf32>, vector<8x576xf32>, vector<16x576xf32> -> vector<16x576xf32>
    %cst_7 = arith.constant 0.000000e+00 : f32
    %6 = vector.broadcast %cst_7 : f32 to vector<16x576xf32>
    %7 = arith.maximumf %5, %6 : vector<16x576xf32>
    %8 = arith.mulf %7, %7 : vector<16x576xf32>
    %9 = vector.broadcast %0 : f32 to vector<16x576xf32>
    %10 = arith.mulf %8, %9 : vector<16x576xf32>
    %11 = vector.broadcast %1 : f32 to vector<16x576xf32>
    %12 = arith.addf %10, %11 : vector<16x576xf32>
    %c0_8 = arith.constant 0 : index
    %c0_9 = arith.constant 0 : index
    %c0_10 = arith.constant 0 : index
    %13 = vector.load %arg5[%c0_8, %c0_9, %c0_10] : memref<1x16x4xf32, #tpu.memory_space<vmem>>, vector<1x16x4xf32>
    %14 = vector.shape_cast %13 : vector<1x16x4xf32> to vector<16x4xf32>
    %c0_11 = arith.constant 0 : index
    %c0_12 = arith.constant 0 : index
    %15 = vector.load %arg6[%c0_11, %c0_12] : memref<4x576xf32, #tpu.memory_space<vmem>>, vector<4x576xf32>
    %cst_13 = arith.constant dense<0.000000e+00> : vector<16x576xf32>
    %16 = tpu.matmul %14, %15, %cst_13 {dimension_numbers = #tpu.dot_dimension_numbers<[1], [0], [0], [1], [0, 0, 1, 1], [], []>} : vector<16x4xf32>, vector<4x576xf32>, vector<16x576xf32> -> vector<16x576xf32>
    %17 = arith.mulf %12, %16 : vector<16x576xf32>
    %c0_14 = arith.constant 0 : index
    %c0_15 = arith.constant 0 : index
    %c0_16 = arith.constant 0 : index
    %18 = vector.load %arg7[%c0_14, %c0_15, %c0_16] : memref<1x16x576xf32, #tpu.memory_space<vmem>>, vector<1x16x576xf32>
    %19 = vector.shape_cast %18 : vector<1x16x576xf32> to vector<16x576xf32>
    %20 = arith.addf %17, %19 : vector<16x576xf32>
    %c0_17 = arith.constant 0 : index
    %c0_18 = arith.constant 0 : index
    %21 = vector.load %arg3[%c0_17, %c0_18] : memref<8x16xf32, #tpu.memory_space<vmem>>, vector<8x16xf32>
    %cst_19 = arith.constant dense<0.000000e+00> : vector<8x576xf32>
    %22 = tpu.matmul %21, %20, %cst_19 {dimension_numbers = #tpu.dot_dimension_numbers<[1], [0], [0], [1], [0, 0, 1, 1], [], []>} : vector<8x16xf32>, vector<16x576xf32>, vector<8x576xf32> -> vector<8x576xf32>
    %c0_20 = arith.constant 0 : index
    %c0_21 = arith.constant 0 : index
    %c0_22 = arith.constant 0 : index
    %23 = vector.load %arg8[%c0_20, %c0_21, %c0_22] : memref<1x8x576xf32, #tpu.memory_space<vmem>>, vector<1x8x576xf32>
    %24 = vector.shape_cast %23 : vector<1x8x576xf32> to vector<8x576xf32>
    %25 = vector.shape_cast %22 : vector<8x576xf32> to vector<1x8x576xf32>
    tpu.vector_store %arg8[%c0_20, %c0_21, %c0_22], %25 {strides = array<i32>} : memref<1x8x576xf32, #tpu.memory_space<vmem>>, vector<1x8x576xf32>,
    return
  }
  func.func @transform_0(%arg0: i32) -> (i32, i32, i32) {
    %c0_i32 = arith.constant 0 : i32
    %c0_i32_0 = arith.constant 0 : i32
    %c0_i32_1 = arith.constant 0 : i32
    return %arg0, %c0_i32, %c0_i32_0 : i32, i32, i32
  }
  func.func @transform_1(%arg0: i32) -> (i32, i32) {
    %c0_i32 = arith.constant 0 : i32
    %c0_i32_0 = arith.constant 0 : i32
    %c0_i32_1 = arith.constant 0 : i32
    return %c0_i32, %c0_i32_0 : i32, i32
  }
  func.func @transform_2(%arg0: i32) -> (i32, i32) {
    %c0_i32 = arith.constant 0 : i32
    %c0_i32_0 = arith.constant 0 : i32
    %c0_i32_1 = arith.constant 0 : i32
    return %c0_i32, %c0_i32_0 : i32, i32
  }
  func.func @transform_3(%arg0: i32) -> (i32, i32) {
    %c0_i32 = arith.constant 0 : i32
    %c0_i32_0 = arith.constant 0 : i32
    %c0_i32_1 = arith.constant 0 : i32
    return %c0_i32, %c0_i32_0 : i32, i32
  }
  func.func @transform_4(%arg0: i32) -> (i32, i32, i32) {
    %c0_i32 = arith.constant 0 : i32
    %c0_i32_0 = arith.constant 0 : i32
    %c0_i32_1 = arith.constant 0 : i32
    return %arg0, %c0_i32, %c0_i32_0 : i32, i32, i32
  }
  func.func @transform_5(%arg0: i32) -> (i32, i32) {
    %c0_i32 = arith.constant 0 : i32
    %c0_i32_0 = arith.constant 0 : i32
    %c0_i32_1 = arith.constant 0 : i32
    return %c0_i32, %c0_i32_0 : i32, i32
  }
  func.func @transform_6(%arg0: i32) -> (i32, i32, i32) {
    %c0_i32 = arith.constant 0 : i32
    %c0_i32_0 = arith.constant 0 : i32
    %c0_i32_1 = arith.constant 0 : i32
    return %arg0, %c0_i32, %c0_i32_0 : i32, i32, i32
  }
  func.func @transform_7(%arg0: i32) -> (i32, i32, i32) {
    %c0_i32 = arith.constant 0 : i32
    %c0_i32_0 = arith.constant 0 : i32
    %c0_i32_1 = arith.constant 0 : i32
    return %arg0, %c0_i32, %c0_i32_0 : i32, i32, i32
  }
}

</mosaic_0001>

<llo_original>
// kernel: reverse.1
$region0: #{reverse.1}
  #allocation0 [shape = 's32[1]{0}', space=sflag, size = 0x4, scoped, tag = 'scoped memory for reverse.1']
  %s0 = inlined_call_operand.vmem [shape: f32[2,16,24,11], index: 0, kind: input, shape index: {}]
  %s1 = inlined_call_operand.vmem [shape: f32[2,16,24,11], index: 1, kind: output, shape index: {}]
  %s2 = scalar_lea.vmem %s0, 160
  %v3 = vld [vmem:[%s2] sm:$0xff]
  %4 = vst [vmem:[%s1] sm:$0xff] %v3
  %s5 = scalar_lea.vmem %s0, 336
  %v6 = vld [vmem:[%s5] sm:$0xff]
  %s7 = scalar_lea.vmem %s1, 176
  %8 = vst [vmem:[%s7] sm:$0xff] %v6
  %s9 = scalar_lea.vmem %s0, 144
  %v10 = vld [vmem:[%s9] sm:$0xff]
  %s11 = scalar_lea.vmem %s1, 16
  %12 = vst [vmem:[%s11] sm:$0xff] %v10
  %s13 = scalar_lea.vmem %s0, 320
  %v14 = vld [vmem:[%s13] sm:$0xff]
  %s15 = scalar_lea.vmem %s1, 192
  %16 = vst [vmem:[%s15] sm:$0xff] %v14
  %s17 = scalar_lea.vmem %s0, 128
  %v18 = vld [vmem:[%s17] sm:$0xff]
  %s19 = scalar_lea.vmem %s1, 32
  %20 = vst [vmem:[%s19] sm:$0xff] %v18
  %s21 = scalar_lea.vmem %s0, 304
  %v22 = vld [vmem:[%s21] sm:$0xff]
  %s23 = scalar_lea.vmem %s1, 208
  %24 = vst [vmem:[%s23] sm:$0xff] %v22
  %s25 = scalar_lea.vmem %s0, 112
  %v26 = vld [vmem:[%s25] sm:$0xff]
  %s27 = scalar_lea.vmem %s1, 48
  %28 = vst [vmem:[%s27] sm:$0xff] %v26
  %s29 = scalar_lea.vmem %s0, 288
  %v30 = vld [vmem:[%s29] sm:$0xff]
  %s31 = scalar_lea.vmem %s1, 224
  %32 = vst [vmem:[%s31] sm:$0xff] %v30
  %s33 = scalar_lea.vmem %s0, 96
  %v34 = vld [vmem:[%s33] sm:$0xff]
  %s35 = scalar_lea.vmem %s1, 64
  %36 = vst [vmem:[%s35] sm:$0xff] %v34
  %s37 = scalar_lea.vmem %s0, 272
  %v38 = vld [vmem:[%s37] sm:$0xff]
  %s39 = scalar_lea.vmem %s1, 240
  %40 = vst [vmem:[%s39] sm:$0xff] %v38
  %s41 = scalar_lea.vmem %s0, 80
  %v42 = vld [vmem:[%s41] sm:$0xff]
  %s43 = scalar_lea.vmem %s1, 80
  %44 = vst [vmem:[%s43] sm:$0xff] %v42
  %s45 = scalar_lea.vmem %s0, 256
  %v46 = vld [vmem:[%s45] sm:$0xff]
  %s47 = scalar_lea.vmem %s1, 256
  %48 = vst [vmem:[%s47] sm:$0xff] %v46
  %s49 = scalar_lea.vmem %s0, 64
  %v50 = vld [vmem:[%s49] sm:$0xff]
  %s51 = scalar_lea.vmem %s1, 96
  %52 = vst [vmem:[%s51] sm:$0xff] %v50
  %s53 = scalar_lea.vmem %s0, 240
  %v54 = vld [vmem:[%s53] sm:$0xff]
  %s55 = scalar_lea.vmem %s1, 272
  %56 = vst [vmem:[%s55] sm:$0xff] %v54
  %s57 = scalar_lea.vmem %s0, 48
  %v58 = vld [vmem:[%s57] sm:$0xff]
  %s59 = scalar_lea.vmem %s1, 112
  %60 = vst [vmem:[%s59] sm:$0xff] %v58
  %s61 = scalar_lea.vmem %s0, 224
  %v62 = vld [vmem:[%s61] sm:$0xff]
  %s63 = scalar_lea.vmem %s1, 288
  %64 = vst [vmem:[%s63] sm:$0xff] %v62
  %s65 = scalar_lea.vmem %s0, 32
  %v66 = vld [vmem:[%s65] sm:$0xff]
  %s67 = scalar_lea.vmem %s1, 128
  %68 = vst [vmem:[%s67] sm:$0xff] %v66
  %s69 = scalar_lea.vmem %s0, 208
  %v70 = vld [vmem:[%s69] sm:$0xff]
  %s71 = scalar_lea.vmem %s1, 304
  %72 = vst [vmem:[%s71] sm:$0xff] %v70
  %s73 = scalar_lea.vmem %s0, 16
  %v74 = vld [vmem:[%s73] sm:$0xff]
  %s75 = scalar_lea.vmem %s1, 144
  %76 = vst [vmem:[%s75] sm:$0xff] %v74
  %s77 = scalar_lea.vmem %s0, 192
  %v78 = vld [vmem:[%s77] sm:$0xff]
  %s79 = scalar_lea.vmem %s1, 320
  %80 = vst [vmem:[%s79] sm:$0xff] %v78
  %v81 = vld [vmem:[%s0] sm:$0xff]
  %s82 = scalar_lea.vmem %s1, 160
  %83 = vst [vmem:[%s82] sm:$0xff] %v81
  %s84 = scalar_lea.vmem %s0, 176
  %v85 = vld [vmem:[%s84] sm:$0xff]
  %s86 = scalar_lea.vmem %s1, 336
  %87 = vst [vmem:[%s86] sm:$0xff] %v85
  %s88 = scalar_lea.vmem %s0, 168
  %v89 = vld [vmem:[%s88] sm:$0xff]
  %s90 = scalar_lea.vmem %s1, 8
  %91 = vst [vmem:[%s90] sm:$0xff] %v89
  %s92 = scalar_lea.vmem %s0, 344
  %v93 = vld [vmem:[%s92] sm:$0xff]
  %s94 = scalar_lea.vmem %s1, 184
  %95 = vst [vmem:[%s94] sm:$0xff] %v93
  %s96 = scalar_lea.vmem %s0, 152
  %v97 = vld [vmem:[%s96] sm:$0xff]
  %s98 = scalar_lea.vmem %s1, 24
  %99 = vst [vmem:[%s98] sm:$0xff] %v97
  %s100 = scalar_lea.vmem %s0, 328
  %v101 = vld [vmem:[%s100] sm:$0xff]
  %s102 = scalar_lea.vmem %s1, 200
  %103 = vst [vmem:[%s102] sm:$0xff] %v101
  %s104 = scalar_lea.vmem %s0, 136
  %v105 = vld [vmem:[%s104] sm:$0xff]
  %s106 = scalar_lea.vmem %s1, 40
  %107 = vst [vmem:[%s106] sm:$0xff] %v105
  %s108 = scalar_lea.vmem %s0, 312
  %v109 = vld [vmem:[%s108] sm:$0xff]
  %s110 = scalar_lea.vmem %s1, 216
  %111 = vst [vmem:[%s110] sm:$0xff] %v109
  %s112 = scalar_lea.vmem %s0, 120
  %v113 = vld [vmem:[%s112] sm:$0xff]
  %s114 = scalar_lea.vmem %s1, 56
  %115 = vst [vmem:[%s114] sm:$0xff] %v113
  %s116 = scalar_lea.vmem %s0, 296
  %v117 = vld [vmem:[%s116] sm:$0xff]
  %s118 = scalar_lea.vmem %s1, 232
  %119 = vst [vmem:[%s118] sm:$0xff] %v117
  %s120 = scalar_lea.vmem %s0, 104
  %v121 = vld [vmem:[%s120] sm:$0xff]
  %s122 = scalar_lea.vmem %s1, 72
  %123 = vst [vmem:[%s122] sm:$0xff] %v121
  %s124 = scalar_lea.vmem %s0, 280
  %v125 = vld [vmem:[%s124] sm:$0xff]
  %s126 = scalar_lea.vmem %s1, 248
  %127 = vst [vmem:[%s126] sm:$0xff] %v125
  %s128 = scalar_lea.vmem %s0, 88
  %v129 = vld [vmem:[%s128] sm:$0xff]
  %s130 = scalar_lea.vmem %s1, 88
  %131 = vst [vmem:[%s130] sm:$0xff] %v129
  %s132 = scalar_lea.vmem %s0, 264
  %v133 = vld [vmem:[%s132] sm:$0xff]
  %s134 = scalar_lea.vmem %s1, 264
  %135 = vst [vmem:[%s134] sm:$0xff] %v133
  %s136 = scalar_lea.vmem %s0, 72
  %v137 = vld [vmem:[%s136] sm:$0xff]
  %s138 = scalar_lea.vmem %s1, 104
  %139 = vst [vmem:[%s138] sm:$0xff] %v137
  %s140 = scalar_lea.vmem %s0, 248
  %v141 = vld [vmem:[%s140] sm:$0xff]
  %s142 = scalar_lea.vmem %s1, 280
  %143 = vst [vmem:[%s142] sm:$0xff] %v141
  %s144 = scalar_lea.vmem %s0, 56
  %v145 = vld [vmem:[%s144] sm:$0xff]
  %s146 = scalar_lea.vmem %s1, 120
  %147 = vst [vmem:[%s146] sm:$0xff] %v145
  %s148 = scalar_lea.vmem %s0, 232
  %v149 = vld [vmem:[%s148] sm:$0xff]
  %s150 = scalar_lea.vmem %s1, 296
  %151 = vst [vmem:[%s150] sm:$0xff] %v149
  %s152 = scalar_lea.vmem %s0, 40
  %v153 = vld [vmem:[%s152] sm:$0xff]
  %s154 = scalar_lea.vmem %s1, 136
  %155 = vst [vmem:[%s154] sm:$0xff] %v153
  %s156 = scalar_lea.vmem %s0, 216
  %v157 = vld [vmem:[%s156] sm:$0xff]
  %s158 = scalar_lea.vmem %s1, 312
  %159 = vst [vmem:[%s158] sm:$0xff] %v157
  %s160 = scalar_lea.vmem %s0, 24
  %v161 = vld [vmem:[%s160] sm:$0xff]
  %s162 = scalar_lea.vmem %s1, 152
  %163 = vst [vmem:[%s162] sm:$0xff] %v161
  %s164 = scalar_lea.vmem %s0, 200
  %v165 = vld [vmem:[%s164] sm:$0xff]
  %s166 = scalar_lea.vmem %s1, 328
  %167 = vst [vmem:[%s166] sm:$0xff] %v165
  %s168 = scalar_lea.vmem %s0, 8
  %v169 = vld [vmem:[%s168] sm:$0xff]
  %s170 = scalar_lea.vmem %s1, 168
  %171 = vst [vmem:[%s170] sm:$0xff] %v169
  %s172 = scalar_lea.vmem %s0, 184
  %v173 = vld [vmem:[%s172] sm:$0xff]
  %s174 = scalar_lea.vmem %s1, 344
  %175 = vst [vmem:[%s174] sm:$0xff] %v173

</llo_original>
